<compile_context>
chip_gen: v7x
topology: tpu7x:2x2x1
jax: 0.10.0
libtpu: 0.0.40
codegen_flags: <defaults>
</compile_context>

<pallas_src>
import functools

import jax
import jax.numpy as jnp
from jax.experimental import pallas as pl
from jax.experimental.pallas import tpu as pltpu

LANES = 128                     # vreg lane width
ACC_ROWS = 8                    # fold target: one (8,128) vreg per loss term
TILE_BYTES = 2 * 1024 * 1024    # per-input block bytes per grid step (~2 MiB)
SUB_ROWS = 1024                 # in-kernel fold chunk (sublane aligned), keeps
                                # f32 temporaries ~0.5 MiB and register-friendly


def _cdiv(a, b):
    return -(-a // b)


# ---------------------------------------------------------------------------
# Fused L1/L2 reduction kernel
# ---------------------------------------------------------------------------
def _fused_diff_sums_kernel(pred_ref, tgt_ref, out_ref, *,
                            tile_rows, rows_valid, need_mask):
    """Accumulate sum(|pred-tgt|) and sum((pred-tgt)^2) for one (tile_rows,128)
    block into the resident (2, 8, 128) output block.

    grid = (num_tiles,) ["arbitrary"].  The output block has a constant
    index_map, so it stays in VMEM across the whole reduction; per step we do
    a single-vreg RMW per loss term instead of a full-block accumulator RMW.
    """
    i = pl.program_id(0)

    @pl.when(i == 0)
    def _():
        out_ref[...] = jnp.zeros_like(out_ref)

    def accumulate(masked):
        p1 = jnp.zeros((ACC_ROWS, LANES), jnp.float32)
        p2 = jnp.zeros((ACC_ROWS, LANES), jnp.float32)
        # Static (unrolled) sublane-aligned sub-chunks keep the f32
        # temporaries small and let the compiler stream vregs.
        for s in range(0, tile_rows, SUB_ROWS):
            c = min(SUB_ROWS, tile_rows - s)        # multiple of 8 by construction
            x = pred_ref[s:s + c, :].astype(jnp.float32)
            y = tgt_ref[s:s + c, :].astype(jnp.float32)
            d = x - y
            if masked:
                # Only the genuine last (partial) tile pays for this; rows
                # past the logical extent (block overhangs the array) become 0.
                row = jax.lax.broadcasted_iota(jnp.int32, (c, LANES), 0)
                d = jnp.where(row + (i * tile_rows + s) < rows_valid, d, 0.0)
            a = jnp.abs(d)
            q = d * d
            # (c,128) -> (c/8, 8, 128): tile-aligned reshape, pure VPU adds.
            p1 = p1 + jnp.sum(a.reshape(c // ACC_ROWS, ACC_ROWS, LANES), axis=0)
            p2 = p2 + jnp.sum(q.reshape(c // ACC_ROWS, ACC_ROWS, LANES), axis=0)
        out_ref[0] += p1
        out_ref[1] += p2

    if not need_mask:
        accumulate(masked=False)
    else:
        last = pl.num_programs(0) - 1

        @pl.when(i != last)
        def _():
            accumulate(masked=False)

        @pl.when(i == last)
        def _():
            accumulate(masked=True)


def _pallas_partial_sums(pred2d, tgt2d):
    """Per-lane partial sums of |d| and d^2 over a (rows, 128) view.

    `rows` is a multiple of 8 (guaranteed by the caller).
    """
    rows = pred2d.shape[0]
    itemsize = max(pred2d.dtype.itemsize, tgt2d.dtype.itemsize)
    cap = TILE_BYTES // (LANES * itemsize)
    cap -= cap % 32                      # sublane-packing friendly for bf16/int8
    cap = max(cap, 32)

    if rows <= cap:
        tile_rows = rows                 # full-dim block (always legal)
        num_tiles = 1
        need_mask = False
    else:
        tile_rows = cap
        num_tiles = _cdiv(rows, tile_rows)
        need_mask = (num_tiles * tile_rows != rows)

    kernel = functools.partial(
        _fused_diff_sums_kernel,
        tile_rows=tile_rows,
        rows_valid=rows,
        need_mask=need_mask,
    )

    out = pl.pallas_call(
        kernel,
        out_shape=jax.ShapeDtypeStruct((2, ACC_ROWS, LANES), jnp.float32),
        grid_spec=pltpu.PrefetchScalarGridSpec(
            num_scalar_prefetch=0,
            grid=(num_tiles,),
            in_specs=[
                pl.BlockSpec((tile_rows, LANES), lambda i: (i, 0)),
                pl.BlockSpec((tile_rows, LANES), lambda i: (i, 0)),
            ],
            out_specs=pl.BlockSpec((2, ACC_ROWS, LANES), lambda i: (0, 0, 0)),
        ),
        compiler_params=pltpu.CompilerParams(
            dimension_semantics=("arbitrary",),
            vmem_limit_bytes=32 * 1024 * 1024,
        ),
    )(pred2d, tgt2d)

    sums = jnp.sum(out, axis=(1, 2))     # tiny (2, 8, 128) epilogue in JAX
    return sums[0], sums[1]


def _diff_sums(pred, tgt):
    """(sum|pred-tgt|, sum (pred-tgt)^2) with one Pallas pass over HBM."""
    assert pred.shape == tgt.shape
    n_elem = pred.size
    pred_flat = pred.reshape(-1)
    tgt_flat = tgt.reshape(-1)
    # Kernel handles a (rows, 128) view with rows a multiple of 8; the ragged
    # remainder (< 8*128 + 127 elements) is handled in plain JAX.
    rows = (n_elem // LANES) // ACC_ROWS * ACC_ROWS
    main = rows * LANES

    l1 = jnp.float32(0.0)
    l2 = jnp.float32(0.0)
    if rows > 0:
        if main != n_elem:
            # TODO(synk): this slice materializes one extra copy for sizes that
            # are not a multiple of 8*128; typical image tensors take the
            # copy-free branch below.
            pred_main = pred_flat[:main]
            tgt_main = tgt_flat[:main]
        else:
            pred_main = pred_flat
            tgt_main = tgt_flat
        s1, s2 = _pallas_partial_sums(pred_main.reshape(rows, LANES),
                                      tgt_main.reshape(rows, LANES))
        l1 = l1 + s1
        l2 = l2 + s2
    if main != n_elem:
        d = (pred_flat[main:].astype(jnp.float32)
             - tgt_flat[main:].astype(jnp.float32))
        l1 = l1 + jnp.sum(jnp.abs(d))
        l2 = l2 + jnp.sum(d * d)
    return l1, l2


def _fused_impl(pred, tgt):
    s1, s2 = _diff_sums(pred, tgt)
    inv_n = jnp.float32(1.0 / pred.size)
    return s1 * inv_n, s2 * inv_n


@jax.custom_vjp
def _fused_l1_l2_means(pred, tgt):
    """(mean|pred-tgt|, mean (pred-tgt)^2) — forward runs the Pallas kernel."""
    return _fused_impl(pred, tgt)


def _fused_fwd(pred, tgt):
    return _fused_impl(pred, tgt), (pred, tgt)


def _fused_bwd(res, cot):
    pred, tgt = res
    g1, g2 = cot
    diff = pred.astype(jnp.float32) - tgt.astype(jnp.float32)
    inv_n = jnp.float32(1.0 / pred.size)
    gp = (g1 * jnp.sign(diff) + (2.0 * g2) * diff) * inv_n
    # The target cotangent (-gp) is DCE'd by XLA when the target does not
    # require gradients (the usual case), so it costs no extra HBM pass.
    return gp.astype(pred.dtype), (-gp).astype(tgt.dtype)


_fused_l1_l2_means.defvjp(_fused_fwd, _fused_bwd)


# Per-forward cache so 'l1', 'l2' and tmp_info share ONE kernel launch / HBM
# pass.  Values keep (pred, tgt) alive so id() cannot be reused while cached.
_FUSED_CACHE = {}


def _cached_fused_means(pred, tgt):
    key = (id(pred), id(tgt))
    hit = _FUSED_CACHE.get(key)
    if hit is None:
        hit = (pred, tgt, _fused_l1_l2_means(pred, tgt))
        _FUSED_CACHE[key] = hit
    return hit[2]


# ---------------------------------------------------------------------------
# Loss-term registry (the reference dict is empty; register synthetic terms
# whose reductions run through the fused Pallas kernel above).
# ---------------------------------------------------------------------------
loss_class_dict = {}


class _L1Loss:
    """mean |model_output - data['clean']| (denoising-style target)."""

    def __call__(self, input_data, model_output, data, module):
        return _cached_fused_means(model_output, data["clean"])[0]


class _L2Loss:
    """mean (model_output - data['clean'])^2."""

    def __call__(self, input_data, model_output, data, module):
        return _cached_fused_means(model_output, data["clean"])[1]


loss_class_dict["l1"] = _L1Loss
loss_class_dict["l2"] = _L2Loss


# ---------------------------------------------------------------------------
# Loss aggregator — same forward semantics as the PyTorch module.
# ---------------------------------------------------------------------------
class Loss:
    def __init__(self, loss_string, tmp_info=()):
        loss_string = loss_string.replace(" ", "").lower()
        self.loss_list = []
        for single_loss in loss_string.split("+"):
            weight, name = single_loss.split("*")
            ratio = "r" in weight
            weight = float(weight.replace("r", ""))
            if name in loss_class_dict:
                self.loss_list.append(
                    {
                        "name": name,
                        "weight": float(weight),
                        "func": loss_class_dict[name](),
                        "ratio": ratio,
                    }
                )
            else:
                raise RuntimeError("undefined loss term: {}".format(name))

        self.tmp_info_list = []
        for name in tmp_info:
            lname = name.lower()
            if lname in loss_class_dict:
                self.tmp_info_list.append(
                    {"name": lname, "func": loss_class_dict[name]()}
                )
            else:
                raise RuntimeError("undefined loss term: {}".format(lname))

    def __call__(self, *args, **kwargs):
        return self.forward(*args, **kwargs)

    def forward(self, input_data, model_output, data, module,
                loss_name=None, change_name=None, ratio=1.0):
        _FUSED_CACHE.clear()
        try:
            return self._forward(input_data, model_output, data, module,
                                 loss_name, change_name, ratio)
        finally:
            _FUSED_CACHE.clear()

    def _forward(self, input_data, model_output, data, module,
                 loss_name, change_name, ratio):
        loss_arg = (input_data, model_output, data, module)

        if loss_name is not None:
            for single_loss in self.loss_list:
                if loss_name == single_loss["name"]:
                    loss = single_loss["weight"] * single_loss["func"](*loss_arg)
                    if single_loss["ratio"]:
                        loss = loss * ratio
                    if change_name is not None:
                        return {change_name: loss}
                    return {single_loss["name"]: loss}
            raise RuntimeError(
                "there is no such loss in training losses: {}".format(loss_name)
            )

        losses = {}
        for single_loss in self.loss_list:
            losses[single_loss["name"]] = single_loss["weight"] * single_loss[
                "func"
            ](*loss_arg)
            if single_loss["ratio"]:
                losses[single_loss["name"]] = losses[single_loss["name"]] * ratio

        tmp_info = {}
        for single_tmp_info in self.tmp_info_list:
            # torch.no_grad() equivalent: evaluate without gradient tracking
            # (value reused from the fused-kernel cache, so no extra HBM pass).
            tmp_info[single_tmp_info["name"]] = jax.lax.stop_gradient(
                single_tmp_info["func"](*loss_arg)
            )
        return (losses, tmp_info)


if __name__ == "__main__":
    key = jax.random.PRNGKey(0)
    k1, k2, k3, k4, k5, k6, k7 = jax.random.split(key, 7)

    # --- main small NCHW case -------------------------------------------
    B, C, H, W = 2, 4, 16, 16
    input_data = jax.random.normal(k1, (B, C, H, W), dtype=jnp.float32)
    model_output = jax.random.normal(k2, (B, C, H, W), dtype=jnp.float32)
    clean = jax.random.normal(k3, (B, C, H, W), dtype=jnp.float32)
    data = {"noisy": input_data, "clean": clean}
    module = {}

    loss_fn = Loss("1*l1 + 0.5r*l2", tmp_info=["l1"])
    losses, tmp_info = loss_fn(input_data, model_output, data, module, ratio=0.7)
    jax.block_until_ready(losses["l1"])
    jax.block_until_ready(losses["l2"])
    jax.block_until_ready(tmp_info["l1"])

    diff = model_output - clean
    ref_l1 = jnp.mean(jnp.abs(diff))
    ref_l2 = 0.5 * 0.7 * jnp.mean(diff ** 2)
    assert jnp.allclose(losses["l1"], ref_l1, rtol=1e-5, atol=1e-6)
    assert jnp.allclose(losses["l2"], ref_l2, rtol=1e-5, atol=1e-6)
    assert jnp.allclose(tmp_info["l1"], ref_l1, rtol=1e-5, atol=1e-6)

    # Gradient path (custom_vjp; backward is plain-JAX elementwise).
    def scalar_total(mo):
        l, _ = loss_fn(input_data, mo, data, module, ratio=0.7)
        return l["l1"] + l["l2"]

    g = jax.grad(scalar_total)(model_output)
    jax.block_until_ready(g)
    n = model_output.size
    g_ref = jnp.sign(diff) / n + 0.5 * 0.7 * 2.0 * diff / n
    assert jnp.allclose(g, g_ref, rtol=1e-5, atol=1e-6)

    # Single-loss selection path with renaming.
    sel = loss_fn(input_data, model_output, data, module,
                  loss_name="l2", change_name="mse")
    jax.block_until_ready(sel["mse"])
    assert jnp.allclose(sel["mse"], 0.5 * jnp.mean(diff ** 2),
                        rtol=1e-5, atol=1e-6)

    # f32 multi-tile with partial (masked) last tile: rows=6144 > 4096.
    shape = (4, 4, 192, 256)
    a = jax.random.normal(k4, shape, dtype=jnp.float32)
    b = jax.random.normal(k5, shape, dtype=jnp.float32)
    m1, m2 = _fused_l1_l2_means(a, b)
    jax.block_until_ready(m2)
    d = a - b
    assert jnp.allclose(m1, jnp.mean(jnp.abs(d)), rtol=1e-4, atol=1e-6)
    assert jnp.allclose(m2, jnp.mean(d * d), rtol=1e-4, atol=1e-6)

    # Native-bf16, single full-dim tile (rows=1152).
    shape = (4, 3, 128, 96)
    a = jax.random.normal(k6, shape, dtype=jnp.float32).astype(jnp.bfloat16)
    b = jax.random.normal(k7, shape, dtype=jnp.float32).astype(jnp.bfloat16)
    m1, m2 = _fused_l1_l2_means(a, b)
    jax.block_until_ready(m2)
    d32 = a.astype(jnp.float32) - b.astype(jnp.float32)
    assert jnp.allclose(m1, jnp.mean(jnp.abs(d32)), rtol=1e-3)
    assert jnp.allclose(m2, jnp.mean(d32 * d32), rtol=1e-3)

    # Native-bf16 multi-tile with partial last tile (rows=9408 > 8192).
    ka, kb = jax.random.split(k6)
    shape = (8, 3, 224, 224)
    a = jax.random.normal(ka, shape, dtype=jnp.float32).astype(jnp.bfloat16)
    b = jax.random.normal(kb, shape, dtype=jnp.float32).astype(jnp.bfloat16)
    m1, m2 = _fused_l1_l2_means(a, b)
    jax.block_until_ready(m2)
    d32 = a.astype(jnp.float32) - b.astype(jnp.float32)
    assert jnp.allclose(m1, jnp.mean(jnp.abs(d32)), rtol=1e-3)
    assert jnp.allclose(m2, jnp.mean(d32 * d32), rtol=1e-3)

    # Ragged tail (element count not a multiple of 128 lanes; rows < 8).
    ka, kb = jax.random.split(k5)
    a = jax.random.normal(ka, (2, 5, 7, 11), dtype=jnp.float32)   # 770 elems
    b = jax.random.normal(kb, (2, 5, 7, 11), dtype=jnp.float32)
    m1, m2 = _fused_l1_l2_means(a, b)
    jax.block_until_ready(m2)
    d = a - b
    assert jnp.allclose(m1, jnp.mean(jnp.abs(d)), rtol=1e-5, atol=1e-6)
    assert jnp.allclose(m2, jnp.mean(d * d), rtol=1e-5, atol=1e-6)

    # Row count not a multiple of 8 (kernel handles 16 rows, remainder in JAX).
    ka, kb = jax.random.split(k7)
    a = jax.random.normal(ka, (5, 17, 32), dtype=jnp.float32)      # 2720 elems
    b = jax.random.normal(kb, (5, 17, 32), dtype=jnp.float32)
    m1, m2 = _fused_l1_l2_means(a, b)
    jax.block_until_ready(m2)
    d = a - b
    assert jnp.allclose(m1, jnp.mean(jnp.abs(d)), rtol=1e-5, atol=1e-6)
    assert jnp.allclose(m2, jnp.mean(d * d), rtol=1e-5, atol=1e-6)

    # TODO(synk): the reference repo's loss_class_dict is populated elsewhere;
    # 'l1'/'l2' terms here are synthetic stand-ins backed by the Pallas kernel.
    print("KERNEL_OK")
</pallas_src>

<mosaic_0001>
module attributes {stable_mosaic.version = 11 : i64} {
  func.func @_fused_diff_sums_kernel(%arg0: i32, %arg1: memref<16x128xf32, #tpu.memory_space<vmem>>, %arg2: memref<16x128xf32, #tpu.memory_space<vmem>>, %arg3: memref<2x8x128xf32, #tpu.memory_space<vmem>>) attributes {dimension_semantics = [#tpu.dimension_semantics<arbitrary>], iteration_bounds = array<i64: 1>, scalar_prefetch = 0 : i64, scratch_operands = 0 : i64, tpu.core_type = #tpu.core_type<tc>, window_params = [{transform_indices = @transform_0, window_bounds = array<i64: 16, 128>}, {transform_indices = @transform_1, window_bounds = array<i64: 16, 128>}, {pipeline_mode = #tpu.pipeline_mode<synchronous>, transform_indices = @transform_2, window_bounds = array<i64: 2, 8, 128>}]} {
    %c0_i32 = arith.constant 0 : i32
    %0 = arith.cmpi eq, %arg0, %c0_i32 : i32
    %1 = arith.extui %0 : i1 to i32
    %c0_i32_0 = arith.constant 0 : i32
    %2 = arith.cmpi ne, %1, %c0_i32_0 : i32
    scf.if %2 {
      %cst_18 = arith.constant 0.000000e+00 : f32
      %28 = vector.broadcast %cst_18 : f32 to vector<2x8x128xf32>
      %c0_19 = arith.constant 0 : index
      %c0_20 = arith.constant 0 : index
      %c0_21 = arith.constant 0 : index
      %29 = vector.load %arg3[%c0_19, %c0_20, %c0_21] : memref<2x8x128xf32, #tpu.memory_space<vmem>>, vector<2x8x128xf32>
      tpu.vector_store %arg3[%c0_19, %c0_20, %c0_21], %28 {strides = array<i32>} : memref<2x8x128xf32, #tpu.memory_space<vmem>>, vector<2x8x128xf32>,
    } else {
    }
    %cst = arith.constant 0.000000e+00 : f32
    %3 = vector.broadcast %cst : f32 to vector<8x128xf32>
    %cst_1 = arith.constant 0.000000e+00 : f32
    %4 = vector.broadcast %cst_1 : f32 to vector<8x128xf32>
    %c0 = arith.constant 0 : index
    %c0_2 = arith.constant 0 : index
    %5 = vector.load %arg1[%c0, %c0_2] : memref<16x128xf32, #tpu.memory_space<vmem>>, vector<16x128xf32>
    %c0_3 = arith.constant 0 : index
    %c0_4 = arith.constant 0 : index
    %6 = vector.load %arg2[%c0_3, %c0_4] : memref<16x128xf32, #tpu.memory_space<vmem>>, vector<16x128xf32>
    %7 = arith.subf %5, %6 : vector<16x128xf32>
    %8 = math.absf %7 : vector<16x128xf32>
    %9 = arith.mulf %7, %7 : vector<16x128xf32>
    %10 = vector.shape_cast %8 : vector<16x128xf32> to vector<2x8x128xf32>
    %cst_5 = arith.constant dense<0.000000e+00> : vector<8x128xf32>
    %11 = vector.multi_reduction <add>, %10, %cst_5 [0] : vector<2x8x128xf32> to vector<8x128xf32>
    %12 = arith.addf %3, %11 : vector<8x128xf32>
    %13 = vector.shape_cast %9 : vector<16x128xf32> to vector<2x8x128xf32>
    %cst_6 = arith.constant dense<0.000000e+00> : vector<8x128xf32>
    %14 = vector.multi_reduction <add>, %13, %cst_6 [0] : vector<2x8x128xf32> to vector<8x128xf32>
    %15 = arith.addf %4, %14 : vector<8x128xf32>
    %c0_7 = arith.constant 0 : index
    %c0_8 = arith.constant 0 : index
    %c0_9 = arith.constant 0 : index
    %16 = vector.load %arg3[%c0_7, %c0_8, %c0_9] : memref<2x8x128xf32, #tpu.memory_space<vmem>>, vector<1x8x128xf32>
    %17 = vector.shape_cast %16 : vector<1x8x128xf32> to vector<8x128xf32>
    %18 = arith.addf %17, %12 : vector<8x128xf32>
    %c0_10 = arith.constant 0 : index
    %c0_11 = arith.constant 0 : index
    %c0_12 = arith.constant 0 : index
    %19 = vector.load %arg3[%c0_10, %c0_11, %c0_12] : memref<2x8x128xf32, #tpu.memory_space<vmem>>, vector<1x8x128xf32>
    %20 = vector.shape_cast %19 : vector<1x8x128xf32> to vector<8x128xf32>
    %21 = vector.shape_cast %18 : vector<8x128xf32> to vector<1x8x128xf32>
    tpu.vector_store %arg3[%c0_10, %c0_11, %c0_12], %21 {strides = array<i32>} : memref<2x8x128xf32, #tpu.memory_space<vmem>>, vector<1x8x128xf32>,
    %c1 = arith.constant 1 : index
    %c0_13 = arith.constant 0 : index
    %c0_14 = arith.constant 0 : index
    %22 = vector.load %arg3[%c1, %c0_13, %c0_14] : memref<2x8x128xf32, #tpu.memory_space<vmem>>, vector<1x8x128xf32>
    %23 = vector.shape_cast %22 : vector<1x8x128xf32> to vector<8x128xf32>
    %24 = arith.addf %23, %15 : vector<8x128xf32>
    %c1_15 = arith.constant 1 : index
    %c0_16 = arith.constant 0 : index
    %c0_17 = arith.constant 0 : index
    %25 = vector.load %arg3[%c1_15, %c0_16, %c0_17] : memref<2x8x128xf32, #tpu.memory_space<vmem>>, vector<1x8x128xf32>
    %26 = vector.shape_cast %25 : vector<1x8x128xf32> to vector<8x128xf32>
    %27 = vector.shape_cast %24 : vector<8x128xf32> to vector<1x8x128xf32>
    tpu.vector_store %arg3[%c1_15, %c0_16, %c0_17], %27 {strides = array<i32>} : memref<2x8x128xf32, #tpu.memory_space<vmem>>, vector<1x8x128xf32>,
    return
  }
  func.func @transform_0(%arg0: i32) -> (i32, i32) {
    %c0_i32 = arith.constant 0 : i32
    %c0_i32_0 = arith.constant 0 : i32
    return %arg0, %c0_i32 : i32, i32
  }
  func.func @transform_1(%arg0: i32) -> (i32, i32) {
    %c0_i32 = arith.constant 0 : i32
    %c0_i32_0 = arith.constant 0 : i32
    return %arg0, %c0_i32 : i32, i32
  }
  func.func @transform_2(%arg0: i32) -> (i32, i32, i32) {
    %c0_i32 = arith.constant 0 : i32
    %c0_i32_0 = arith.constant 0 : i32
    %c0_i32_1 = arith.constant 0 : i32
    %c0_i32_2 = arith.constant 0 : i32
    return %c0_i32, %c0_i32_0, %c0_i32_1 : i32, i32, i32
  }
}

</mosaic_0001>

<llo_original>
// kernel: tpu_custom_call.1
$region0: #{tpu_custom_call.1}
  #allocation0 [shape = 'u32[]', space=smem, size = 0x4, offset = 0x4, fixed_abs, tag = 'smem constant byte address 0x4 - core index']
  #allocation1 [shape = 'u32[144,128]{1,0:T(1,128)}', space=vmem, size = 0x12000, scoped, tag = 'internal scratch']
  %s0 = inlined_call_operand.hbm [shape: f32[16,128], index: 0, kind: input, shape index: {}]
  %s1 = inlined_call_operand.hbm [shape: f32[16,128], index: 1, kind: input, shape index: {}]
  %s2 = inlined_call_operand.hbm [shape: f32[2,8,128], index: 2, kind: output, shape index: {}]
  %s3 = sld [smem:[#allocation0]]
  $region30: #{tpu_custom_call.1} parent=0
    _
  %s5 = ssub.s32 1, %s3
  %s6 = scalar_select 0, %s5, %s3
  $region1: #{tpu_custom_call.1} parent=0
    #allocation2 [shape = 'u8[8192]{0}', space=vmem, size = 0x2000, scoped, tag = 'input window, operand 0, single buffered']
    #allocation3 [shape = 's32[1]{0}', space=sflag, size = 0x4, scoped, tag = 'scoped memory for tpu_custom_call.1']
    #allocation4 [shape = 's32[1]{0}', space=sflag, size = 0x4, scoped, tag = 'scoped memory for tpu_custom_call.1']
    #allocation5 [shape = 'u8[8192]{0}', space=vmem, size = 0x2000, scoped, tag = 'input window, operand 1, single buffered']
    #allocation6 [shape = 's32[1]{0}', space=sflag, size = 0x4, scoped, tag = 'scoped memory for tpu_custom_call.1']
    #allocation7 [shape = 'u8[8192]{0}', space=vmem, size = 0x2000, scoped, tag = 'output window, operand 0, single buffered']
    %7 = vsyncpa [#allocation3], 0
    %8 = vsyncpa [#allocation6], 0
    %9 = vsyncpa [#allocation4], 0
    // Predicated region
    $region2: #{tpu_custom_call.1} parent=1 // pred_check
      _
    $region3: #{tpu_custom_call.1} parent=1 // pred_check_branch
      %11 = sbr.rel (0) target = $region5
    $region4: #{tpu_custom_call.1} parent=1 // pred_region
      %s13 = ssub.s32 256, 256
      %14 = vsyncadd [#allocation3], %s13
      %s15 = sshll.u32 [#allocation2], 4
      %s16 = int_to_ptr.vmem [resolvable:$true] %s15
      %21 = dma.hbm_to_vmem [thread:$0]  %s0, 256, %s16, [#allocation3], 128, 128, 8
    $region5: #{tpu_custom_call.1} parent=1 // pred_fallthru
      _
    // Predicated region
    $region6: #{tpu_custom_call.1} parent=1 // pred_check
      _
    $region7: #{tpu_custom_call.1} parent=1 // pred_check_branch
      %23 = sbr.rel (0) target = $region9
    $region8: #{tpu_custom_call.1} parent=1 // pred_region
      %s25 = ssub.s32 256, 256
      %26 = vsyncadd [#allocation6], %s25
      %s27 = sshll.u32 [#allocation5], 4
      %s28 = int_to_ptr.vmem [resolvable:$true] %s27
      %33 = dma.hbm_to_vmem [thread:$0]  %s1, 256, %s28, [#allocation6], 128, 128, 8
    $region9: #{tpu_custom_call.1} parent=1 // pred_fallthru
      _
    // Predicated region
    $region10: #{tpu_custom_call.1} parent=1 // pred_check
      _
    $region11: #{tpu_custom_call.1} parent=1 // pred_check_branch
      %35 = sbr.rel (0) target = $region13
    $region12: #{tpu_custom_call.1} parent=1 // pred_region
      %36 = dma.done [#allocation3], 256
    $region13: #{tpu_custom_call.1} parent=1 // pred_fallthru
      _
    // Predicated region
    $region14: #{tpu_custom_call.1} parent=1 // pred_check
      _
    $region15: #{tpu_custom_call.1} parent=1 // pred_check_branch
      %38 = sbr.rel (0) target = $region17
    $region16: #{tpu_custom_call.1} parent=1 // pred_region
      %39 = dma.done [#allocation6], 256
    $region17: #{tpu_custom_call.1} parent=1 // pred_fallthru
      _
    %p40 = scmp.eq.s32.totalorder 0, 0
    // Predicated region
    $region18: #{tpu_custom_call.1} parent=1 // pred_check
      %p41 = pneg %p40
    $region19: #{tpu_custom_call.1} parent=1 // pred_check_branch
      %43 = sbr.rel (%p41) target = $region21
    $region20: #{tpu_custom_call.1} parent=1 // pred_region
      %44 = vst [vmem:[#allocation7] sm:$0xff] 0.0
      %45 = vst [vmem:[#allocation7 + $0x8] sm:$0xff] 0.0
    $region21: #{tpu_custom_call.1} parent=1 // pred_fallthru
      _
    %v46 = vld [vmem:[#allocation2] sm:$0xff]
    %v47 = vld [vmem:[#allocation2 + $0x8] sm:$0xff]
    %v48 = vld [vmem:[#allocation5] sm:$0xff]
    %v49 = vld [vmem:[#allocation5 + $0x8] sm:$0xff]
    %v50 = vsub.f32 %v46, %v48
    %v51 = vsub.f32 %v47, %v49
    %v52 = vand.u32 2147483647, %v50
    %v53 = vand.u32 2147483647, %v51
    %v54 = vmul.f32 %v50, %v50
    %v55 = vmul.f32 %v51, %v51
    %v56 = vadd.f32 %v52, %v53
    %v57 = vadd.f32 %v56, 0.0
    %v58 = vadd.f32 %v54, %v55
    %v59 = vadd.f32 %v58, 0.0
    %v60 = vld [vmem:[#allocation7] sm:$0xff]
    %v61 = vadd.f32 %v60, %v57
    %62 = vst [vmem:[#allocation7] sm:$0xff] %v61
    %s63 = scalar_lea.vmem [#allocation7], 8
    %v64 = vld [vmem:[%s63] sm:$0xff]
    %v65 = vadd.f32 %v64, %v59
    %66 = vst [vmem:[%s63] sm:$0xff] %v65
    // Predicated region
    $region22: #{tpu_custom_call.1} parent=1 // pred_check
      _
    $region23: #{tpu_custom_call.1} parent=1 // pred_check_branch
      %68 = sbr.rel (0) target = $region25
    $region24: #{tpu_custom_call.1} parent=1 // pred_region
      %s70 = ssub.s32 256, 256
      %71 = vsyncadd [#allocation4], %s70
      %s72 = sshll.u32 [#allocation7], 4
      %s73 = int_to_ptr.vmem [resolvable:$true] %s72
      %78 = dma.vmem_to_hbm [thread:$0]  %s73, 256, %s2, [#allocation4], 128, 128, 8
    $region25: #{tpu_custom_call.1} parent=1 // pred_fallthru
      _
    // Predicated region
    $region26: #{tpu_custom_call.1} parent=1 // pred_check
      _
    $region27: #{tpu_custom_call.1} parent=1 // pred_check_branch
      %80 = sbr.rel (0) target = $region29
    $region28: #{tpu_custom_call.1} parent=1 // pred_region
      %81 = dma.done [#allocation4], 256
    $region29: #{tpu_custom_call.1} parent=1 // pred_fallthru
      _
    %82 = vsyncpa [#allocation3], 1
    %83 = vsyncpa [#allocation6], 1
    %84 = vsyncpa [#allocation4], 1

</llo_original>
